<compile_context>
chip_gen: v6e
topology: v6e:2x2x1
jax: 0.10.0
libtpu: 0.0.40
codegen_flags: <defaults>
</compile_context>

<pallas_src>
import jax
import jax.numpy as jnp
import numpy as np
from jax.experimental import pallas as pl
from jax.experimental.pallas import tpu as pltpu


def _round_up(v, m):
    return ((v + m - 1) // m) * m


def _choose_tile(M, tile_m, lane=128):
    """Row-tile (lane axis) selection: multiple of 128, <= padded M, and an
    even number of grid steps when possible (v7x two-TensorCore sharding)."""
    m_pad = _round_up(M, lane)
    tile = max(lane, min((int(tile_m) // lane) * lane, m_pad))
    g = pl.cdiv(M, tile)
    if g == 1 and M > lane:
        # Split into 2 steps so both TensorCores get work on v7x.
        tile = max(lane, _round_up(pl.cdiv(M, 2), lane))
    elif g > 1 and g % 2 == 1:
        # Nudge toward an even step count (otherwise one TC gets ~ (g+1)/2g of the work).
        for g_try in (g + 1, g + 3, g + 5):
            t = max(lane, _round_up(pl.cdiv(M, g_try), lane))
            if pl.cdiv(M, t) % 2 == 0:
                tile = t
                break
    return tile


def _make_kernel(tile, chunk):
    """Fused (folded-linear12 + ReLU + linear3 + ReLU) kernel over lane chunks."""
    n_chunks = tile // chunk

    def kernel(xt_ref, w12_ref, b12_ref, w3c_ref, b3_ref, o_ref):
        w12 = w12_ref[...]            # (128, 5)   fused W2 @ W1 (resident)
        b12 = b12_ref[...]            # (128, 1)   fused W2 @ b1 + b2
        w3c = w3c_ref[...]            # (128, 1)   W3 as a column
        b3 = b3_ref[0, 0]             # scalar bias from SMEM
        # Short static chunk loop; each chunk's (128, chunk) activation lives
        # only in vregs and dies at the store below (no h2 VMEM slab).
        for ci in range(n_chunks):
            sl = pl.ds(ci * chunk, chunk)
            xc = xt_ref[:, sl]                                             # (5, chunk)
            h = jnp.dot(w12, xc, preferred_element_type=jnp.float32)       # MXU (128, chunk)
            h = jnp.maximum(h + b12, 0.0)                                  # bias + ReLU (VPU)
            # Layer 3 (out_features == 1): VPU multiply + sublane reduction
            # instead of an N=1 MXU matmul.
            o = jnp.sum(h * w3c, axis=0, keepdims=True) + b3               # (1, chunk)
            o_ref[:, sl] = jnp.maximum(o, 0.0).astype(o_ref.dtype)

    return kernel


def simple_linear_net_pallas(x, params, *, tile_m=8192):
    """x: (n, 5, H, W) float32.  Returns (n, 1, H, W) float32."""
    w1, b1, w2, b2, w3, b3 = params          # PyTorch layouts: W (out, in), b (out,)
    n, c, *spatial = x.shape
    assert c == 5, "linear1 expects in_features == 5 (so c must be 5)"
    M = int(np.prod(x.shape)) // 5

    # Fold linear1 into linear2 (exact: no nonlinearity in between).
    w12 = jnp.dot(w2, w1, preferred_element_type=jnp.float32)                  # (128, 5)
    b12 = (jnp.dot(w2, b1, preferred_element_type=jnp.float32) + b2)[:, None]  # (128, 1)
    w3c = jnp.reshape(w3, (128, 1))                                            # (128, 1)
    b3s = jnp.reshape(b3, (1, 1)).astype(jnp.float32)                          # SMEM scalar

    # Lane-dense layout plumbing: MLP rows go on the lane (last) axis.
    xt = x.reshape(M, 5).T                                                     # (5, M)

    tile = _choose_tile(M, tile_m)
    chunk = 256 if tile % 256 == 0 else 128
    grid = (pl.cdiv(M, tile),)          # ragged last block, no jnp.pad

    out = pl.pallas_call(
        _make_kernel(tile, chunk),
        out_shape=jax.ShapeDtypeStruct((1, M), jnp.float32),
        grid_spec=pltpu.PrefetchScalarGridSpec(
            num_scalar_prefetch=0,
            grid=grid,
            in_specs=[
                pl.BlockSpec((5, tile), lambda i: (0, i)),          # x^T tile (lane-dense)
                pl.BlockSpec((128, 5), lambda i: (0, 0)),           # fused W12 (resident)
                pl.BlockSpec((128, 1), lambda i: (0, 0)),           # fused b12 column
                pl.BlockSpec((128, 1), lambda i: (0, 0)),           # W3 column
                pl.BlockSpec(memory_space=pltpu.MemorySpace.SMEM),  # b3 scalar (1,1)
            ],
            out_specs=pl.BlockSpec((1, tile), lambda i: (0, i)),    # lane-dense output
        ),
        compiler_params=pltpu.CompilerParams(
            dimension_semantics=("parallel",)),
    )(xt, w12, b12, w3c, b3s)

    return out[0].reshape(n, 1, *spatial)


def init_params(key):
    """Deterministic synthetic params matching nn.Linear(5,20)/(20,128)/(128,1),
    in PyTorch layout: W (out, in), b (out,)."""
    ks = jax.random.split(key, 6)

    def linear(kw, kb, fan_in, fan_out):
        bound = 1.0 / np.sqrt(fan_in)
        w = jax.random.uniform(kw, (fan_out, fan_in), jnp.float32, -bound, bound)
        b = jax.random.uniform(kb, (fan_out,), jnp.float32, -bound, bound)
        return w, b

    w1, b1 = linear(ks[0], ks[1], 5, 20)      # (20, 5), (20,)
    w2, b2 = linear(ks[2], ks[3], 20, 128)    # (128, 20), (128,)
    w3, b3 = linear(ks[4], ks[5], 128, 1)     # (1, 128), (1,)
    return (w1, b1, w2, b2, w3, b3)


def reference_forward(x, params):
    """Pure-JAX reference in the original (unfused) two-matmul form."""
    w1, b1, w2, b2, w3, b3 = params
    n, c, *spatial = x.shape
    flat = x.reshape(-1, 5)
    h1 = flat @ w1.T + b1
    h2 = jnp.maximum(h1 @ w2.T + b2, 0.0)
    h3 = jnp.maximum(h2 @ w3.T + b3, 0.0)
    return h3.reshape(n, 1, *spatial)


if __name__ == "__main__":
    key = jax.random.PRNGKey(0)
    kx, kp = jax.random.split(key)

    n, c, H, W = 2, 5, 16, 16          # c must be 5 (linear1 in_features)
    x = jax.random.normal(kx, (n, c, H, W), jnp.float32)
    params = init_params(kp)

    out = simple_linear_net_pallas(x, params)   # M=512 -> tile=256, grid=(2,), 1 chunk
    out = jax.block_until_ready(out)

    ref = reference_forward(x, params)
    assert out.shape == (n, 1, H, W), out.shape
    # Slightly relaxed rtol: the W2@W1 pre-fold is algebraically exact but
    # perturbs fp32 rounding at the ~1e-6 relative level.
    np.testing.assert_allclose(np.asarray(out), np.asarray(ref), rtol=1e-4, atol=1e-5)

    print("KERNEL_OK")
</pallas_src>

<mosaic_0001>
module attributes {stable_mosaic.version = 11 : i64} {
  func.func @kernel(%arg0: i32, %arg1: memref<5x256xf32, #tpu.memory_space<vmem>>, %arg2: memref<128x5xf32, #tpu.memory_space<vmem>>, %arg3: memref<128x1xf32, #tpu.memory_space<vmem>>, %arg4: memref<128x1xf32, #tpu.memory_space<vmem>>, %arg5: memref<1x1xf32, #tpu.memory_space<smem>>, %arg6: memref<1x256xf32, #tpu.memory_space<vmem>>) attributes {dimension_semantics = [#tpu.dimension_semantics<parallel>], iteration_bounds = array<i64: 2>, scalar_prefetch = 0 : i64, scratch_operands = 0 : i64, tpu.core_type = #tpu.core_type<tc>, window_params = [{transform_indices = @transform_0, window_bounds = array<i64: 5, 256>}, {pipeline_mode = #tpu.pipeline_mode<synchronous>, transform_indices = @transform_1, window_bounds = array<i64: 128, 5>}, {pipeline_mode = #tpu.pipeline_mode<synchronous>, transform_indices = @transform_2, window_bounds = array<i64: 128, 1>}, {pipeline_mode = #tpu.pipeline_mode<synchronous>, transform_indices = @transform_3, window_bounds = array<i64: 128, 1>}, {transform_indices = @transform_4, window_bounds = array<i64: 1, 1>}, {transform_indices = @transform_5, window_bounds = array<i64: 1, 256>}]} {
    %c0 = arith.constant 0 : index
    %c0_0 = arith.constant 0 : index
    %0 = vector.load %arg2[%c0, %c0_0] : memref<128x5xf32, #tpu.memory_space<vmem>>, vector<128x5xf32>
    %c0_1 = arith.constant 0 : index
    %c0_2 = arith.constant 0 : index
    %1 = vector.load %arg3[%c0_1, %c0_2] : memref<128x1xf32, #tpu.memory_space<vmem>>, vector<128x1xf32>
    %c0_3 = arith.constant 0 : index
    %c0_4 = arith.constant 0 : index
    %2 = vector.load %arg4[%c0_3, %c0_4] : memref<128x1xf32, #tpu.memory_space<vmem>>, vector<128x1xf32>
    %c0_5 = arith.constant 0 : index
    %c0_6 = arith.constant 0 : index
    %3 = memref.load %arg5[%c0_5, %c0_6] : memref<1x1xf32, #tpu.memory_space<smem>>
    %c0_7 = arith.constant 0 : index
    %c0_8 = arith.constant 0 : index
    %4 = vector.load %arg1[%c0_7, %c0_8] : memref<5x256xf32, #tpu.memory_space<vmem>>, vector<5x256xf32>
    %cst = arith.constant dense<0.000000e+00> : vector<128x256xf32>
    %5 = tpu.matmul %0, %4, %cst {dimension_numbers = #tpu.dot_dimension_numbers<[1], [0], [0], [1], [0, 0, 1, 1], [], []>} : vector<128x5xf32>, vector<5x256xf32>, vector<128x256xf32> -> vector<128x256xf32>
    %6 = vector.broadcast %1 : vector<128x1xf32> to vector<128x256xf32>
    %7 = arith.addf %5, %6 : vector<128x256xf32>
    %cst_9 = arith.constant 0.000000e+00 : f32
    %8 = vector.broadcast %cst_9 : f32 to vector<128x256xf32>
    %9 = arith.maximumf %7, %8 : vector<128x256xf32>
    %10 = vector.broadcast %2 : vector<128x1xf32> to vector<128x256xf32>
    %11 = arith.mulf %9, %10 : vector<128x256xf32>
    %cst_10 = arith.constant dense<0.000000e+00> : vector<256xf32>
    %12 = vector.multi_reduction <add>, %11, %cst_10 [0] : vector<128x256xf32> to vector<256xf32>
    %13 = vector.shape_cast %12 : vector<256xf32> to vector<1x256xf32>
    %14 = vector.broadcast %3 : f32 to vector<1x256xf32>
    %15 = arith.addf %13, %14 : vector<1x256xf32>
    %cst_11 = arith.constant 0.000000e+00 : f32
    %16 = vector.broadcast %cst_11 : f32 to vector<1x256xf32>
    %17 = arith.maximumf %15, %16 : vector<1x256xf32>
    %c0_12 = arith.constant 0 : index
    %c0_13 = arith.constant 0 : index
    %18 = vector.load %arg6[%c0_12, %c0_13] : memref<1x256xf32, #tpu.memory_space<vmem>>, vector<1x256xf32>
    tpu.vector_store %arg6[%c0_12, %c0_13], %17 {strides = array<i32>} : memref<1x256xf32, #tpu.memory_space<vmem>>, vector<1x256xf32>,
    return
  }
  func.func @transform_0(%arg0: i32) -> (i32, i32) {
    %c0_i32 = arith.constant 0 : i32
    %c0_i32_0 = arith.constant 0 : i32
    return %c0_i32, %arg0 : i32, i32
  }
  func.func @transform_1(%arg0: i32) -> (i32, i32) {
    %c0_i32 = arith.constant 0 : i32
    %c0_i32_0 = arith.constant 0 : i32
    %c0_i32_1 = arith.constant 0 : i32
    return %c0_i32, %c0_i32_0 : i32, i32
  }
  func.func @transform_2(%arg0: i32) -> (i32, i32) {
    %c0_i32 = arith.constant 0 : i32
    %c0_i32_0 = arith.constant 0 : i32
    %c0_i32_1 = arith.constant 0 : i32
    return %c0_i32, %c0_i32_0 : i32, i32
  }
  func.func @transform_3(%arg0: i32) -> (i32, i32) {
    %c0_i32 = arith.constant 0 : i32
    %c0_i32_0 = arith.constant 0 : i32
    %c0_i32_1 = arith.constant 0 : i32
    return %c0_i32, %c0_i32_0 : i32, i32
  }
  func.func @transform_4(%arg0: i32) -> (i32, i32) {
    %c0_i32 = arith.constant 0 : i32
    %c0_i32_0 = arith.constant 0 : i32
    %c0_i32_1 = arith.constant 0 : i32
    return %c0_i32, %c0_i32_0 : i32, i32
  }
  func.func @transform_5(%arg0: i32) -> (i32, i32) {
    %c0_i32 = arith.constant 0 : i32
    %c0_i32_0 = arith.constant 0 : i32
    return %c0_i32, %arg0 : i32, i32
  }
}

</mosaic_0001>

<llo_original>
// kernel: tpu_custom_call.1
$region0: #{tpu_custom_call.1}
  #allocation0 [shape = 'u32[]', space=smem, size = 0x4, offset = 0x4, fixed_abs, tag = 'smem constant byte address 0x4 - core index']
  #allocation1 [shape = 'u32[144,128]{1,0:T(1,128)}', space=vmem, size = 0x12000, scoped, tag = 'internal scratch']
  #allocation2 [shape = 'f32[1,1]{1,0:T(1,128)S(6)}', space=smem, size = 0x200, scoped, tag = 'scoped memory for tpu_custom_call.1']
  %s0 = inlined_call_operand.vmem [shape: f32[5,512], index: 0, kind: input, shape index: {}]
  %s1 = inlined_call_operand.vmem [shape: f32[128,5], index: 1, kind: input, shape index: {}]
  %s2 = inlined_call_operand.vmem [shape: f32[128,1], index: 2, kind: input, shape index: {}]
  %s3 = inlined_call_operand.vmem [shape: f32[128,1], index: 3, kind: input, shape index: {}]
  %s4 = inlined_call_operand.<no memory space> [shape: f32[1,1], index: 4, kind: input, shape index: {}]
  %s5 = inlined_call_operand.hbm [shape: f32[1,512], index: 5, kind: output, shape index: {}]
  %s6 = sld [smem:[#allocation0]]
  $region53: #{tpu_custom_call.1} parent=0
    _
  %s8 = ssub.s32 1, %s6
  %s9 = scalar_select 0, %s8, %s6
  %10 = sst [smem:[#allocation2]] %s4
  $region1: #{tpu_custom_call.1} parent=0
    #allocation3 [shape = 'u8[2048]{0}', space=vmem, size = 0x800, scoped, tag = 'output window, operand 0']
    #allocation4 [shape = 's32[2]{0}', space=sflag, size = 0x8, scoped, tag = 'scoped memory for tpu_custom_call.1']
    %11 = vsyncpa [#allocation4], 0
    %s12 = scalar_lea.sflag [#allocation4], 1
    %13 = vsyncpa %s12, 0
    loop: start=0, step=1, limit=4
    $region2: #{tpu_custom_call.1} parent=1 // loop_pre_header
      _
    $region3: #{tpu_custom_call.1} parent=1 // loop_header
      %s15 = sphi 0, %s19
      %p16 = scmp.ge.s32.totalorder %s15, 4
      %s25 = sphi 0, %s27
      %s28 = sphi 0, %s25
      %s29 = sphi 0, %s28
      %s45 = sphi 0, %s29
      %s49 = sphi 0, %s49
      %s51 = sphi 0, %s49
      %s52 = sphi 0, %s51
      %s66 = sphi 0, %s52
      %s70 = sphi 0, %s70
      %s72 = sphi 0, %s70
      %s73 = sphi 0, %s72
      %s87 = sphi 0, %s73
      %s91 = sphi 0, %s91
      %s93 = sphi 0, %s91
      %s94 = sphi 0, %s93
      %s108 = sphi 0, %s94
      %s112 = sphi 0, %s112
      %s114 = sphi 0, %s112
      %s115 = sphi 0, %s114
      %s129 = sphi 0, %s115
      %s135 = sphi 0, %s137
      %s138 = sphi 0, %s135
      %s139 = sphi 0, %s138
      %s155 = sphi 0, %s139
    $region4: #{tpu_custom_call.1} parent=1 // loop_header_branch
      %18 = sbr.rel (%p16) target = $region8
    $region5: #{tpu_custom_call.1} parent=1 // loop_body
      %s20 = ssub.s32 %s15, 1
      %s21 = ssub.s32 %s15, 2
      %s22 = sadd.s32 %s15, 1
      %s23 = ssub.s32 %s15, %s22
      %p24 = scmp.eq.s32.totalorder %s23, 0
      %s26 = sadd.s32 %s25, 1
      %s27 = scalar_select %p24, %s25, %s26
      %p30 = pneg %p24
      %p31 = scmp.eq.s32.totalorder %s15, 1
      %p32 = por %p30, %p31
      %p33 = scmp.ne.s32.totalorder %s25, %s28
      %p34 = scmp.eq.s32.totalorder %s15, 0
      %p35 = por %p33, %p34
      %p36 = scmp.ne.s32.totalorder %s25, %s28
      %p37 = scmp.eq.s32.totalorder %s20, 1
      %p38 = por %p36, %p37
      %p39 = scmp.ne.s32.totalorder %s28, %s29
      %p40 = scmp.eq.s32.totalorder %s20, 0
      %p41 = por %p39, %p40
      %p42 = scmp.ne.s32.totalorder %s28, %s29
      %p43 = scmp.eq.s32.totalorder %s21, 1
      %p44 = por %p42, %p43
      %p46 = scmp.ne.s32.totalorder %s29, %s45
      %p47 = scmp.eq.s32.totalorder %s21, 0
      %p48 = por %p46, %p47
      %s50 = sadd.s32 %s49, 1
      %p53 = scmp.eq.s32.totalorder %s15, 1
      %p54 = scmp.ne.s32.totalorder %s49, %s51
      %p55 = scmp.eq.s32.totalorder %s15, 0
      %p56 = por %p54, %p55
      %p57 = scmp.ne.s32.totalorder %s49, %s51
      %p58 = scmp.eq.s32.totalorder %s20, 1
      %p59 = por %p57, %p58
      %p60 = scmp.ne.s32.totalorder %s51, %s52
      %p61 = scmp.eq.s32.totalorder %s20, 0
      %p62 = por %p60, %p61
      %p63 = scmp.ne.s32.totalorder %s51, %s52
      %p64 = scmp.eq.s32.totalorder %s21, 1
      %p65 = por %p63, %p64
      %p67 = scmp.ne.s32.totalorder %s52, %s66
      %p68 = scmp.eq.s32.totalorder %s21, 0
      %p69 = por %p67, %p68
      %s71 = sadd.s32 %s70, 1
      %p74 = scmp.eq.s32.totalorder %s15, 1
      %p75 = scmp.ne.s32.totalorder %s70, %s72
      %p76 = scmp.eq.s32.totalorder %s15, 0
      %p77 = por %p75, %p76
      %p78 = scmp.ne.s32.totalorder %s70, %s72
      %p79 = scmp.eq.s32.totalorder %s20, 1
      %p80 = por %p78, %p79
      %p81 = scmp.ne.s32.totalorder %s72, %s73
      %p82 = scmp.eq.s32.totalorder %s20, 0
      %p83 = por %p81, %p82
      %p84 = scmp.ne.s32.totalorder %s72, %s73
      %p85 = scmp.eq.s32.totalorder %s21, 1
      %p86 = por %p84, %p85
      %p88 = scmp.ne.s32.totalorder %s73, %s87
      %p89 = scmp.eq.s32.totalorder %s21, 0
      %p90 = por %p88, %p89
      %s92 = sadd.s32 %s91, 1
      %p95 = scmp.eq.s32.totalorder %s15, 1
      %p96 = scmp.ne.s32.totalorder %s91, %s93
      %p97 = scmp.eq.s32.totalorder %s15, 0
      %p98 = por %p96, %p97
      %p99 = scmp.ne.s32.totalorder %s91, %s93
      %p100 = scmp.eq.s32.totalorder %s20, 1
      %p101 = por %p99, %p100
      %p102 = scmp.ne.s32.totalorder %s93, %s94
      %p103 = scmp.eq.s32.totalorder %s20, 0
      %p104 = por %p102, %p103
      %p105 = scmp.ne.s32.totalorder %s93, %s94
      %p106 = scmp.eq.s32.totalorder %s21, 1
      %p107 = por %p105, %p106
      %p109 = scmp.ne.s32.totalorder %s94, %s108
      %p110 = scmp.eq.s32.totalorder %s21, 0
      %p111 = por %p109, %p110
      %s113 = sadd.s32 %s112, 1
      %p116 = scmp.eq.s32.totalorder %s15, 1
      %p117 = scmp.ne.s32.totalorder %s112, %s114
      %p118 = scmp.eq.s32.totalorder %s15, 0
      %p119 = por %p117, %p118
      %p120 = scmp.ne.s32.totalorder %s112, %s114
      %p121 = scmp.eq.s32.totalorder %s20, 1
      %p122 = por %p120, %p121
      %p123 = scmp.ne.s32.totalorder %s114, %s115
      %p124 = scmp.eq.s32.totalorder %s20, 0
      %p125 = por %p123, %p124
      %p126 = scmp.ne.s32.totalorder %s114, %s115
      %p127 = scmp.eq.s32.totalorder %s21, 1
      %p128 = por %p126, %p127
      %p130 = scmp.ne.s32.totalorder %s115, %s129
      %p131 = scmp.eq.s32.totalorder %s21, 0
      %p132 = por %p130, %p131
      %s133 = ssub.s32 %s15, %s22
      %p134 = scmp.eq.s32.totalorder %s133, 0
      %s136 = sadd.s32 %s135, 1
      %s137 = scalar_select %p134, %s135, %s136
      %p140 = pneg %p134
      %p141 = scmp.eq.s32.totalorder %s15, 1
      %p142 = por %p140, %p141
      %p143 = scmp.ne.s32.totalorder %s135, %s138
      %p144 = scmp.eq.s32.totalorder %s15, 0
      %p145 = por %p143, %p144
      %p146 = scmp.ne.s32.totalorder %s135, %s138
      %p147 = scmp.eq.s32.totalorder %s20, 1
      %p148 = por %p146, %p147
      %p149 = scmp.ne.s32.totalorder %s138, %s139
      %p150 = scmp.eq.s32.totalorder %s20, 0
      %p151 = por %p149, %p150
      %p152 = scmp.ne.s32.totalorder %s138, %s139
      %p153 = scmp.eq.s32.totalorder %s21, 1
      %p154 = por %p152, %p153
      %p156 = scmp.ne.s32.totalorder %s139, %s155
      %p157 = scmp.eq.s32.totalorder %s21, 0
      %p158 = por %p156, %p157
      %p159 = scmp.le.s32.totalorder 1, %s15
      %p160 = scmp.lt.s32.totalorder %s15, 3
      %p161 = pnand %p159, %p160
      %p162 = pneg %p161
      // Predicated region
      $region9: #{tpu_custom_call.1} parent=5 // pred_check
        _
      $region10: #{tpu_custom_call.1} parent=5 // pred_check_branch
        %164 = sbr.rel (%p161) target = $region12
      $region11: #{tpu_custom_call.1} parent=5 // pred_region
        %s165 = ssub.s32 %s15, 1
        // Predicated region
        $region13: #{tpu_custom_call.1} parent=11 // pred_check
          %p166 = pneg %p62
        $region14: #{tpu_custom_call.1} parent=11 // pred_check_branch
          %168 = sbr.rel (%p166) target = $region16
        $region15: #{tpu_custom_call.1} parent=11 // pred_region
          _
        $region16: #{tpu_custom_call.1} parent=11 // pred_fallthru
          _
        // Predicated region
        $region17: #{tpu_custom_call.1} parent=11 // pred_check
          %p169 = pneg %p83
        $region18: #{tpu_custom_call.1} parent=11 // pred_check_branch
          %171 = sbr.rel (%p169) target = $region20
        $region19: #{tpu_custom_call.1} parent=11 // pred_region
          _
        $region20: #{tpu_custom_call.1} parent=11 // pred_fallthru
          _
        // Predicated region
        $region21: #{tpu_custom_call.1} parent=11 // pred_check
          %p172 = pneg %p104
        $region22: #{tpu_custom_call.1} parent=11 // pred_check_branch
          %174 = sbr.rel (%p172) target = $region24
        $region23: #{tpu_custom_call.1} parent=11 // pred_region
          _
        $region24: #{tpu_custom_call.1} parent=11 // pred_fallthru
          _
        // Predicated region
        $region25: #{tpu_custom_call.1} parent=11 // pred_check
          %p175 = pneg %p125
        $region26: #{tpu_custom_call.1} parent=11 // pred_check_branch
          %177 = sbr.rel (%p175) target = $region28
        $region27: #{tpu_custom_call.1} parent=11 // pred_region
          _
        $region28: #{tpu_custom_call.1} parent=11 // pred_fallthru
          _
      $region12: #{tpu_custom_call.1} parent=5 // pred_fallthru
        _
      %p178 = scmp.lt.s32.totalorder %s15, 2
      // Predicated region
      $region29: #{tpu_custom_call.1} parent=5 // pred_check
        %p179 = pneg %p178
      $region30: #{tpu_custom_call.1} parent=5 // pred_check_branch
        %181 = sbr.rel (%p179) target = $region32
      $region31: #{tpu_custom_call.1} parent=5 // pred_region
        // Predicated region
        $region33: #{tpu_custom_call.1} parent=31 // pred_check
          %p182 = pneg %p35
        $region34: #{tpu_custom_call.1} parent=31 // pred_check_branch
          %184 = sbr.rel (%p182) target = $region36
        $region35: #{tpu_custom_call.1} parent=31 // pred_region
          %s185 = smul.u32 2, %s15
          %p186 = scmp.lt.s32.totalorder %s185, 3
          %s187 = scalar_select %p186, %s185, 3
          %s188 = smul.addr %s187, 8
          %s189 = scalar_lea.vmem %s0, %s188
          %s190 = smul.u32 2, %s15
        $region36: #{tpu_custom_call.1} parent=31 // pred_fallthru
          _
      $region32: #{tpu_custom_call.1} parent=5 // pred_fallthru
        _
      %p191 = scmp.le.s32.totalorder 1, %s15
      %p192 = scmp.lt.s32.totalorder %s15, 3
      %p193 = pnand %p191, %p192
      %p194 = pneg %p193
      // Predicated region
      $region37: #{tpu_custom_call.1} parent=5 // pred_check
        _
      $region38: #{tpu_custom_call.1} parent=5 // pred_check_branch
        %196 = sbr.rel (%p193) target = $region40
      $region39: #{tpu_custom_call.1} parent=5 // pred_region
        %s197 = ssub.s32 %s15, 1
        %s198 = smul.u32 2, %s20
        %p199 = scmp.lt.s32.totalorder %s198, 3
        %s200 = scalar_select %p199, %s198, 3
        %s201 = smul.addr %s200, 8
        %s202 = scalar_lea.vmem %s0, %s201
        %p203 = pneg %p41
        %p204 = pneg %p38
        %p205 = pneg %p62
        %p206 = pneg %p59
        %p207 = pneg %p83
        %p208 = pneg %p80
        %p209 = pneg %p104
        %p210 = pneg %p101
        %p211 = pneg %p125
        %p212 = pneg %p122
        %p213 = pneg %p151
        %p214 = pneg %p148
        %s215 = sand.u32 %s138, 1
        %s216 = scalar_lea.sflag [#allocation4], %s215
        %s217 = sand.u32 %s138, 1
        %s218 = smul.addr %s217, 2
        %s219 = scalar_lea.vmem [#allocation3], %s218
        %s220 = smul.u32 2, %s20
        %p221 = scmp.lt.s32.totalorder %s220, 3
        %s222 = scalar_select %p221, %s220, 3
        %s223 = smul.addr %s222, 8
        %s224 = scalar_lea.vmem %s0, %s223
        %s225 = smul.u32 2, %s20
        %s226 = smul.u32 2, %s20
        %v227 = vld [vmem:[%s1] sm:$0xff]
        %v228 = vld [vmem:[%s1 + $0x8] sm:$0xff]
        %v229 = vld [vmem:[%s1 + $0x10] sm:$0xff]
        %v230 = vld [vmem:[%s1 + $0x18] sm:$0xff]
        %v231 = vld [vmem:[%s1 + $0x20] sm:$0xff]
        %v232 = vld [vmem:[%s1 + $0x28] sm:$0xff]
        %v233 = vld [vmem:[%s1 + $0x30] sm:$0xff]
        %v234 = vld [vmem:[%s1 + $0x38] sm:$0xff]
        %v235 = vld [vmem:[%s1 + $0x40] sm:$0xff]
        %v236 = vld [vmem:[%s1 + $0x48] sm:$0xff]
        %v237 = vld [vmem:[%s1 + $0x50] sm:$0xff]
        %v238 = vld [vmem:[%s1 + $0x58] sm:$0xff]
        %v239 = vld [vmem:[%s1 + $0x60] sm:$0xff]
        %v240 = vld [vmem:[%s1 + $0x68] sm:$0xff]
        %v241 = vld [vmem:[%s1 + $0x70] sm:$0xff]
        %v242 = vld [vmem:[%s1 + $0x78] sm:$0xff]
        %v243 = vld [vmem:[%s2] sm:$0xff]
        %v244 = vld [vmem:[%s2 + $0x8] sm:$0xff]
        %v245 = vld [vmem:[%s2 + $0x10] sm:$0xff]
        %v246 = vld [vmem:[%s2 + $0x18] sm:$0xff]
        %v247 = vld [vmem:[%s2 + $0x20] sm:$0xff]
        %v248 = vld [vmem:[%s2 + $0x28] sm:$0xff]
        %v249 = vld [vmem:[%s2 + $0x30] sm:$0xff]
        %v250 = vld [vmem:[%s2 + $0x38] sm:$0xff]
        %v251 = vld [vmem:[%s2 + $0x40] sm:$0xff]
        %v252 = vld [vmem:[%s2 + $0x48] sm:$0xff]
        %v253 = vld [vmem:[%s2 + $0x50] sm:$0xff]
        %v254 = vld [vmem:[%s2 + $0x58] sm:$0xff]
        %v255 = vld [vmem:[%s2 + $0x60] sm:$0xff]
        %v256 = vld [vmem:[%s2 + $0x68] sm:$0xff]
        %v257 = vld [vmem:[%s2 + $0x70] sm:$0xff]
        %v258 = vld [vmem:[%s2 + $0x78] sm:$0xff]
        %v259 = vld [vmem:[%s3] sm:$0xff]
        %v260 = vld [vmem:[%s3 + $0x8] sm:$0xff]
        %v261 = vld [vmem:[%s3 + $0x10] sm:$0xff]
        %v262 = vld [vmem:[%s3 + $0x18] sm:$0xff]
        %v263 = vld [vmem:[%s3 + $0x20] sm:$0xff]
        %v264 = vld [vmem:[%s3 + $0x28] sm:$0xff]
        %v265 = vld [vmem:[%s3 + $0x30] sm:$0xff]
        %v266 = vld [vmem:[%s3 + $0x38] sm:$0xff]
        %v267 = vld [vmem:[%s3 + $0x40] sm:$0xff]
        %v268 = vld [vmem:[%s3 + $0x48] sm:$0xff]
        %v269 = vld [vmem:[%s3 + $0x50] sm:$0xff]
        %v270 = vld [vmem:[%s3 + $0x58] sm:$0xff]
        %v271 = vld [vmem:[%s3 + $0x60] sm:$0xff]
        %v272 = vld [vmem:[%s3 + $0x68] sm:$0xff]
        %v273 = vld [vmem:[%s3 + $0x70] sm:$0xff]
        %v274 = vld [vmem:[%s3 + $0x78] sm:$0xff]
        %s275 = sld [smem:[#allocation2]]
        %v276 = vld [vmem:[%s224] sm:$0x1f]
        %v277 = vld [vmem:[%s224 + $0x8] sm:$0x1f]
        %279 = vset.pattern.permute.xlu0 0
        %280 = vperm.xlu0 %279, %v243
        %v281 = vpop.permute.xlu0 %280
        %284 = vset.pattern.permute.xlu0 0
        %285 = vperm.xlu0 %284, %v244
        %v286 = vpop.permute.xlu0 %285
        %289 = vset.pattern.permute.xlu0 0
        %290 = vperm.xlu0 %289, %v245
        %v291 = vpop.permute.xlu0 %290
        %294 = vset.pattern.permute.xlu0 0
        %295 = vperm.xlu0 %294, %v246
        %v296 = vpop.permute.xlu0 %295
        %299 = vset.pattern.permute.xlu0 0
        %300 = vperm.xlu0 %299, %v247
        %v301 = vpop.permute.xlu0 %300
        %304 = vset.pattern.permute.xlu0 0
        %305 = vperm.xlu0 %304, %v248
        %v306 = vpop.permute.xlu0 %305
        %309 = vset.pattern.permute.xlu0 0
        %310 = vperm.xlu0 %309, %v249
        %v311 = vpop.permute.xlu0 %310
        %314 = vset.pattern.permute.xlu0 0
        %315 = vperm.xlu0 %314, %v250
        %v316 = vpop.permute.xlu0 %315
        %319 = vset.pattern.permute.xlu0 0
        %320 = vperm.xlu0 %319, %v251
        %v321 = vpop.permute.xlu0 %320
        %324 = vset.pattern.permute.xlu0 0
        %325 = vperm.xlu0 %324, %v252
        %v326 = vpop.permute.xlu0 %325
        %329 = vset.pattern.permute.xlu0 0
        %330 = vperm.xlu0 %329, %v253
        %v331 = vpop.permute.xlu0 %330
        %334 = vset.pattern.permute.xlu0 0
        %335 = vperm.xlu0 %334, %v254
        %v336 = vpop.permute.xlu0 %335
        %339 = vset.pattern.permute.xlu0 0
        %340 = vperm.xlu0 %339, %v255
        %v341 = vpop.permute.xlu0 %340
        %344 = vset.pattern.permute.xlu0 0
        %345 = vperm.xlu0 %344, %v256
        %v346 = vpop.permute.xlu0 %345
        %349 = vset.pattern.permute.xlu0 0
        %350 = vperm.xlu0 %349, %v257
        %v351 = vpop.permute.xlu0 %350
        %354 = vset.pattern.permute.xlu0 0
        %355 = vperm.xlu0 %354, %v258
        %v356 = vpop.permute.xlu0 %355
        %vm358 = vcmask 39936
        %v360 = vsel %vm358, %v227, 0
        %v363 = vsel %vm358, %v228, 0
        %v366 = vsel %vm358, %v229, 0
        %v369 = vsel %vm358, %v230, 0
        %v372 = vsel %vm358, %v231, 0
        %v375 = vsel %vm358, %v232, 0
        %v378 = vsel %vm358, %v233, 0
        %v381 = vsel %vm358, %v234, 0
        %v384 = vsel %vm358, %v235, 0
        %v387 = vsel %vm358, %v236, 0
        %v390 = vsel %vm358, %v237, 0
        %v393 = vsel %vm358, %v238, 0
        %v396 = vsel %vm358, %v239, 0
        %v399 = vsel %vm358, %v240, 0
        %v402 = vsel %vm358, %v241, 0
        %v405 = vsel %vm358, %v242, 0
        %vm407 = vcmask 1044480
        %v409 = vsel %vm407, %v276, 0
        %v412 = vsel %vm407, %v277, 0
        %414 = vmatprep.subr.mxu0 0.0
        %415 = vmatpush1.msra.mxu0 0.0
        %416 = vmatprep.subr.mxu0 0.0
        %417 = vmatpush1.msra.mxu0 0.0
        %418 = vmatprep.subr.mxu0 0.0
        %419 = vmatpush1.msra.mxu0 0.0
        %420 = vmatprep.subr.mxu0 0.0
        %421 = vmatpush1.msra.mxu0 0.0
        %422 = vmatprep.subr.mxu0 0.0
        %423 = vmatpush1.msra.mxu0 0.0
        %424 = vmatprep.subr.mxu0 0.0
        %425 = vmatpush1.msra.mxu0 0.0
        %426 = vmatprep.subr.mxu0 0.0
        %427 = vmatpush1.msra.mxu0 0.0
        %428 = vmatprep.subr.mxu0 0.0
        %429 = vmatpush1.msra.mxu0 0.0
        %430 = vmatprep.subr.mxu0 0.0
        %431 = vmatpush1.msra.mxu0 0.0
        %432 = vmatprep.subr.mxu0 0.0
        %433 = vmatpush1.msra.mxu0 0.0
        %434 = vmatprep.subr.mxu0 0.0
        %435 = vmatpush1.msra.mxu0 0.0
        %436 = vmatprep.subr.mxu0 0.0
        %437 = vmatpush1.msra.mxu0 0.0
        %438 = vmatprep.subr.mxu0 0.0
        %439 = vmatpush1.msra.mxu0 0.0
        %440 = vmatprep.subr.mxu0 0.0
        %441 = vmatpush1.msra.mxu0 0.0
        %442 = vmatprep.subr.mxu0 0.0
        %443 = vmatpush1.msra.mxu0 0.0
        %444 = vmatprep.subr.mxu0 %v412
        %445 = vmatpush1.msra.mxu0 %v409
        %446 = vmatprep.subr.mxu0 0.0
        %447 = vmatpush2.msra.mxu0 0.0
        %448 = vmatprep.subr.mxu0 0.0
        %449 = vmatpush2.msra.mxu0 0.0
        %450 = vmatprep.subr.mxu0 0.0
        %451 = vmatpush2.msra.mxu0 0.0
        %452 = vmatprep.subr.mxu0 0.0
        %453 = vmatpush2.msra.mxu0 0.0
        %454 = vmatprep.subr.mxu0 0.0
        %455 = vmatpush2.msra.mxu0 0.0
        %456 = vmatprep.subr.mxu0 0.0
        %457 = vmatpush2.msra.mxu0 0.0
        %458 = vmatprep.subr.mxu0 0.0
        %459 = vmatpush2.msra.mxu0 0.0
        %460 = vmatprep.subr.mxu0 0.0
        %461 = vmatpush2.msra.mxu0 0.0
        %462 = vmatprep.subr.mxu0 0.0
        %463 = vmatpush2.msra.mxu0 0.0
        %464 = vmatprep.subr.mxu0 0.0
        %465 = vmatpush2.msra.mxu0 0.0
        %466 = vmatprep.subr.mxu0 0.0
        %467 = vmatpush2.msra.mxu0 0.0
        %468 = vmatprep.subr.mxu0 0.0
        %469 = vmatpush2.msra.mxu0 0.0
        %470 = vmatprep.subr.mxu0 0.0
        %471 = vmatpush2.msra.mxu0 0.0
        %472 = vmatprep.subr.mxu0 0.0
        %473 = vmatpush2.msra.mxu0 0.0
        %474 = vmatprep.subr.mxu0 0.0
        %475 = vmatpush2.msra.mxu0 0.0
        %476 = vmatprep.subr.mxu0 0.0
        %477 = vmatpush2.msra.mxu0 0.0
        %478 = vmatprep.mubr.f32.mxu0 0.0
        %479 = vmatmul.mubr.f32.gmra.mxu0 %v360
        %v480 = vpop.f32.mrf.mxu0
        %v481 = vadd.f32 %v281, %v480
        %v482 = vpop.f32.mrf.mxu0
        %v483 = vadd.f32 %v281, %v482
        %484 = vmatprep.mubr.f32.mxu0 0.0
        %485 = vmatmul.mubr.f32.gmra.mxu0 %v363
        %v486 = vpop.f32.mrf.mxu0
        %v487 = vadd.f32 %v286, %v486
        %v488 = vpop.f32.mrf.mxu0
        %v489 = vadd.f32 %v286, %v488
        %490 = vmatprep.mubr.f32.mxu0 0.0
        %491 = vmatmul.mubr.f32.gmra.mxu0 %v366
        %v492 = vpop.f32.mrf.mxu0
        %v493 = vadd.f32 %v291, %v492
        %v494 = vpop.f32.mrf.mxu0
        %v495 = vadd.f32 %v291, %v494
        %496 = vmatprep.mubr.f32.mxu0 0.0
        %497 = vmatmul.mubr.f32.gmra.mxu0 %v369
        %v498 = vpop.f32.mrf.mxu0
        %v499 = vadd.f32 %v296, %v498
        %v500 = vpop.f32.mrf.mxu0
        %v501 = vadd.f32 %v296, %v500
        %502 = vmatprep.mubr.f32.mxu0 0.0
        %503 = vmatmul.mubr.f32.gmra.mxu0 %v372
        %v504 = vpop.f32.mrf.mxu0
        %v505 = vadd.f32 %v301, %v504
        %v506 = vpop.f32.mrf.mxu0
        %v507 = vadd.f32 %v301, %v506
        %508 = vmatprep.mubr.f32.mxu0 0.0
        %509 = vmatmul.mubr.f32.gmra.mxu0 %v375
        %v510 = vpop.f32.mrf.mxu0
        %v511 = vadd.f32 %v306, %v510
        %v512 = vpop.f32.mrf.mxu0
        %v513 = vadd.f32 %v306, %v512
        %514 = vmatprep.mubr.f32.mxu0 0.0
        %515 = vmatmul.mubr.f32.gmra.mxu0 %v378
        %v516 = vpop.f32.mrf.mxu0
        %v517 = vadd.f32 %v311, %v516
        %v518 = vpop.f32.mrf.mxu0
        %v519 = vadd.f32 %v311, %v518
        %520 = vmatprep.mubr.f32.mxu0 0.0
        %521 = vmatmul.mubr.f32.gmra.mxu0 %v381
        %v522 = vpop.f32.mrf.mxu0
        %v523 = vadd.f32 %v316, %v522
        %v524 = vpop.f32.mrf.mxu0
        %v525 = vadd.f32 %v316, %v524
        %526 = vmatprep.mubr.f32.mxu0 0.0
        %527 = vmatmul.mubr.f32.gmra.mxu0 %v384
        %v528 = vpop.f32.mrf.mxu0
        %v529 = vadd.f32 %v321, %v528
        %v530 = vpop.f32.mrf.mxu0
        %v531 = vadd.f32 %v321, %v530
        %532 = vmatprep.mubr.f32.mxu0 0.0
        %533 = vmatmul.mubr.f32.gmra.mxu0 %v387
        %v534 = vpop.f32.mrf.mxu0
        %v535 = vadd.f32 %v326, %v534
        %v536 = vpop.f32.mrf.mxu0
        %v537 = vadd.f32 %v326, %v536
        %538 = vmatprep.mubr.f32.mxu0 0.0
        %539 = vmatmul.mubr.f32.gmra.mxu0 %v390
        %v540 = vpop.f32.mrf.mxu0
        %v541 = vadd.f32 %v331, %v540
        %v542 = vpop.f32.mrf.mxu0
        %v543 = vadd.f32 %v331, %v542
        %544 = vmatprep.mubr.f32.mxu0 0.0
        %545 = vmatmul.mubr.f32.gmra.mxu0 %v393
        %v546 = vpop.f32.mrf.mxu0
        %v547 = vadd.f32 %v336, %v546
        %v548 = vpop.f32.mrf.mxu0
        %v549 = vadd.f32 %v336, %v548
        %550 = vmatprep.mubr.f32.mxu0 0.0
        %551 = vmatmul.mubr.f32.gmra.mxu0 %v396
        %v552 = vpop.f32.mrf.mxu0
        %v553 = vadd.f32 %v341, %v552
        %v554 = vpop.f32.mrf.mxu0
        %v555 = vadd.f32 %v341, %v554
        %556 = vmatprep.mubr.f32.mxu0 0.0
        %557 = vmatmul.mubr.f32.gmra.mxu0 %v399
        %v558 = vpop.f32.mrf.mxu0
        %v559 = vadd.f32 %v346, %v558
        %v560 = vpop.f32.mrf.mxu0
        %v561 = vadd.f32 %v346, %v560
        %562 = vmatprep.mubr.f32.mxu0 0.0
        %563 = vmatmul.mubr.f32.gmra.mxu0 %v402
        %v564 = vpop.f32.mrf.mxu0
        %v565 = vadd.f32 %v351, %v564
        %v566 = vpop.f32.mrf.mxu0
        %v567 = vadd.f32 %v351, %v566
        %568 = vmatprep.mubr.f32.mxu0 0.0
        %569 = vmatmul.mubr.f32.gmra.mxu0 %v405
        %v570 = vpop.f32.mrf.mxu0
        %v571 = vadd.f32 %v356, %v570
        %v572 = vpop.f32.mrf.mxu0
        %v573 = vadd.f32 %v356, %v572
        %574 = vdwg.mxu0
        %v575 = vmax.f32 %v481, 0.0
        %v576 = vmax.f32 %v483, 0.0
        %v577 = vmax.f32 %v487, 0.0
        %v578 = vmax.f32 %v489, 0.0
        %v579 = vmax.f32 %v493, 0.0
        %v580 = vmax.f32 %v495, 0.0
        %v581 = vmax.f32 %v499, 0.0
        %v582 = vmax.f32 %v501, 0.0
        %v583 = vmax.f32 %v505, 0.0
        %v584 = vmax.f32 %v507, 0.0
        %v585 = vmax.f32 %v511, 0.0
        %v586 = vmax.f32 %v513, 0.0
        %v587 = vmax.f32 %v517, 0.0
        %v588 = vmax.f32 %v519, 0.0
        %v589 = vmax.f32 %v523, 0.0
        %v590 = vmax.f32 %v525, 0.0
        %v591 = vmax.f32 %v529, 0.0
        %v592 = vmax.f32 %v531, 0.0
        %v593 = vmax.f32 %v535, 0.0
        %v594 = vmax.f32 %v537, 0.0
        %v595 = vmax.f32 %v541, 0.0
        %v596 = vmax.f32 %v543, 0.0
        %v597 = vmax.f32 %v547, 0.0
        %v598 = vmax.f32 %v549, 0.0
        %v599 = vmax.f32 %v553, 0.0
        %v600 = vmax.f32 %v555, 0.0
        %v601 = vmax.f32 %v559, 0.0
        %v602 = vmax.f32 %v561, 0.0
        %v603 = vmax.f32 %v565, 0.0
        %v604 = vmax.f32 %v567, 0.0
        %v605 = vmax.f32 %v571, 0.0
        %v606 = vmax.f32 %v573, 0.0
        %608 = vset.pattern.permute.xlu0 0
        %609 = vperm.xlu0 %608, %v259
        %v610 = vpop.permute.xlu0 %609
        %613 = vset.pattern.permute.xlu0 0
        %614 = vperm.xlu0 %613, %v260
        %v615 = vpop.permute.xlu0 %614
        %618 = vset.pattern.permute.xlu0 0
        %619 = vperm.xlu0 %618, %v261
        %v620 = vpop.permute.xlu0 %619
        %623 = vset.pattern.permute.xlu0 0
        %624 = vperm.xlu0 %623, %v262
        %v625 = vpop.permute.xlu0 %624
        %628 = vset.pattern.permute.xlu0 0
        %629 = vperm.xlu0 %628, %v263
        %v630 = vpop.permute.xlu0 %629
        %633 = vset.pattern.permute.xlu0 0
        %634 = vperm.xlu0 %633, %v264
        %v635 = vpop.permute.xlu0 %634
        %638 = vset.pattern.permute.xlu0 0
        %639 = vperm.xlu0 %638, %v265
        %v640 = vpop.permute.xlu0 %639
        %643 = vset.pattern.permute.xlu0 0
        %644 = vperm.xlu0 %643, %v266
        %v645 = vpop.permute.xlu0 %644
        %648 = vset.pattern.permute.xlu0 0
        %649 = vperm.xlu0 %648, %v267
        %v650 = vpop.permute.xlu0 %649
        %653 = vset.pattern.permute.xlu0 0
        %654 = vperm.xlu0 %653, %v268
        %v655 = vpop.permute.xlu0 %654
        %658 = vset.pattern.permute.xlu0 0
        %659 = vperm.xlu0 %658, %v269
        %v660 = vpop.permute.xlu0 %659
        %663 = vset.pattern.permute.xlu0 0
        %664 = vperm.xlu0 %663, %v270
        %v665 = vpop.permute.xlu0 %664
        %668 = vset.pattern.permute.xlu0 0
        %669 = vperm.xlu0 %668, %v271
        %v670 = vpop.permute.xlu0 %669
        %673 = vset.pattern.permute.xlu0 0
        %674 = vperm.xlu0 %673, %v272
        %v675 = vpop.permute.xlu0 %674
        %678 = vset.pattern.permute.xlu0 0
        %679 = vperm.xlu0 %678, %v273
        %v680 = vpop.permute.xlu0 %679
        %683 = vset.pattern.permute.xlu0 0
        %684 = vperm.xlu0 %683, %v274
        %v685 = vpop.permute.xlu0 %684
        %v687 = vmul.f32 %v575, %v610
        %v688 = vmul.f32 %v576, %v610
        %v689 = vmul.f32 %v577, %v615
        %v690 = vmul.f32 %v578, %v615
        %v691 = vmul.f32 %v579, %v620
        %v692 = vmul.f32 %v580, %v620
        %v693 = vmul.f32 %v581, %v625
        %v694 = vmul.f32 %v582, %v625
        %v695 = vmul.f32 %v583, %v630
        %v696 = vmul.f32 %v584, %v630
        %v697 = vmul.f32 %v585, %v635
        %v698 = vmul.f32 %v586, %v635
        %v699 = vmul.f32 %v587, %v640
        %v700 = vmul.f32 %v588, %v640
        %v701 = vmul.f32 %v589, %v645
        %v702 = vmul.f32 %v590, %v645
        %v703 = vmul.f32 %v591, %v650
        %v704 = vmul.f32 %v592, %v650
        %v705 = vmul.f32 %v593, %v655
        %v706 = vmul.f32 %v594, %v655
        %v707 = vmul.f32 %v595, %v660
        %v708 = vmul.f32 %v596, %v660
        %v709 = vmul.f32 %v597, %v665
        %v710 = vmul.f32 %v598, %v665
        %v711 = vmul.f32 %v599, %v670
        %v712 = vmul.f32 %v600, %v670
        %v713 = vmul.f32 %v601, %v675
        %v714 = vmul.f32 %v602, %v675
        %v715 = vmul.f32 %v603, %v680
        %v716 = vmul.f32 %v604, %v680
        %v717 = vmul.f32 %v605, %v685
        %v718 = vmul.f32 %v606, %v685
        %v719 = vadd.f32 %v687, %v689
        %v720 = vadd.f32 %v719, %v691
        %v721 = vadd.f32 %v720, %v693
        %v722 = vadd.f32 %v721, %v695
        %v723 = vadd.f32 %v722, %v697
        %v724 = vadd.f32 %v723, %v699
        %v725 = vadd.f32 %v724, %v701
        %v726 = vadd.f32 %v725, %v703
        %v727 = vadd.f32 %v726, %v705
        %v728 = vadd.f32 %v727, %v707
        %v729 = vadd.f32 %v728, %v709
        %v730 = vadd.f32 %v729, %v711
        %v731 = vadd.f32 %v730, %v713
        %v732 = vadd.f32 %v731, %v715
        %v733 = vadd.f32 %v732, %v717
        %v734 = vrot.slane %v733, 4
        %v735 = vadd.f32 %v733, %v734
        %v736 = vrot.slane %v735, 2
        %v737 = vadd.f32 %v735, %v736
        %v738 = vrot.slane %v737, 1
        %v739 = vadd.f32 %v737, %v738
        %v740 = vadd.f32 %v688, %v690
        %v741 = vadd.f32 %v740, %v692
        %v742 = vadd.f32 %v741, %v694
        %v743 = vadd.f32 %v742, %v696
        %v744 = vadd.f32 %v743, %v698
        %v745 = vadd.f32 %v744, %v700
        %v746 = vadd.f32 %v745, %v702
        %v747 = vadd.f32 %v746, %v704
        %v748 = vadd.f32 %v747, %v706
        %v749 = vadd.f32 %v748, %v708
        %v750 = vadd.f32 %v749, %v710
        %v751 = vadd.f32 %v750, %v712
        %v752 = vadd.f32 %v751, %v714
        %v753 = vadd.f32 %v752, %v716
        %v754 = vadd.f32 %v753, %v718
        %v755 = vrot.slane %v754, 4
        %v756 = vadd.f32 %v754, %v755
        %v757 = vrot.slane %v756, 2
        %v758 = vadd.f32 %v756, %v757
        %v759 = vrot.slane %v758, 1
        %v760 = vadd.f32 %v758, %v759
        %v761 = vstv %s275
        %v762 = vadd.f32 %v739, %v761
        %v763 = vadd.f32 %v760, %v761
        %v764 = vmax.f32 %v762, 0.0
        %v765 = vmax.f32 %v763, 0.0
        %v768 = vcombine.low %v764, %v765
        %v770 = vunpack.c.l.s4 1966171168
        %v771 = vunpack.c.0.s8 %v770
        %v772 = vlaneseq
        %v773 = vshrl.u32 %v772, 7
        %v774 = vsub.s32 %v771, %v773
        %v775 = vrot.slane %v768, %v774
        %v777 = vunpack.c.l.s4 1966171168
        %v778 = vunpack.c.0.s8 %v777
        %v779 = vlaneseq
        %v780 = vshrl.u32 %v779, 7
        %v781 = vsub.s32 %v778, %v780
        %v782 = vrot.slane %v775, %v781
        %v784 = vlaneseq
        %vm785 = vcmp.ge.s32.totalorder %v784, 0
        %vm786 = vcmp.lt.s32.totalorder %v784, 256
        %vm787 = vmand %vm785, %vm786
        %788 = vst.msk [vmem:[%s219] sm:$0x3] %vm787, %v782
        %s789 = sand.u32 %s138, 1
        %s790 = scalar_lea.sflag [#allocation4], %s789
        %s791 = sand.u32 %s138, 1
        %s792 = smul.addr %s791, 2
        %s793 = scalar_lea.vmem [#allocation3], %s792
        // Predicated region
        $region41: #{tpu_custom_call.1} parent=39 // pred_check
          %p794 = pneg %p148
        $region42: #{tpu_custom_call.1} parent=39 // pred_check_branch
          %796 = sbr.rel (%p794) target = $region44
        $region43: #{tpu_custom_call.1} parent=39 // pred_region
          %s797 = smul.u32 2, %s20
          %s799 = ssub.s32 32, 32
          %800 = vsyncadd %s790, %s799
          %s801 = smul.addr %s797, 16
          %s802 = scalar_lea.hbm %s5, %s801
          %s804 = sshll.u32 %s793, 4
          %s805 = int_to_ptr.vmem [resolvable:$true] %s804
          %807 = dma.vmem_to_hbm [thread:$0]  %s805, 32, %s802, %s790
        $region44: #{tpu_custom_call.1} parent=39 // pred_fallthru
          _
      $region40: #{tpu_custom_call.1} parent=5 // pred_fallthru
        _
      %p808 = scmp.le.s32.totalorder 2, %s15
      // Predicated region
      $region45: #{tpu_custom_call.1} parent=5 // pred_check
        %p809 = pneg %p808
      $region46: #{tpu_custom_call.1} parent=5 // pred_check_branch
        %811 = sbr.rel (%p809) target = $region48
      $region47: #{tpu_custom_call.1} parent=5 // pred_region
        %s812 = ssub.s32 %s15, 2
        // Predicated region
        $region49: #{tpu_custom_call.1} parent=47 // pred_check
          %p813 = pneg %p154
        $region50: #{tpu_custom_call.1} parent=47 // pred_check_branch
          %815 = sbr.rel (%p813) target = $region52
        $region51: #{tpu_custom_call.1} parent=47 // pred_region
          %s816 = sand.u32 %s139, 1
          %s817 = scalar_lea.sflag [#allocation4], %s816
          %s818 = sand.u32 %s139, 1
          %s819 = smul.addr %s818, 2
          %s820 = scalar_lea.vmem [#allocation3], %s819
          %821 = dma.done %s817, 32
        $region52: #{tpu_custom_call.1} parent=47 // pred_fallthru
          _
      $region48: #{tpu_custom_call.1} parent=5 // pred_fallthru
        _
    $region6: #{tpu_custom_call.1} parent=1 // loop_footer
      %s19 = sadd.s32 1, %s15
    $region7: #{tpu_custom_call.1} parent=1 // loop_footer_branch
      %14 = sbr.rel target = $region3
    $region8: #{tpu_custom_call.1} parent=1 // loop_exit
      _
    %822 = vsyncpa [#allocation4], 1
    %s823 = scalar_lea.sflag [#allocation4], 1
    %824 = vsyncpa %s823, 1

</llo_original>
